<compile_context>
chip_gen: v6e
topology: v6e:2x2x1
jax: 0.10.0
libtpu: 0.0.40
codegen_flags: <defaults>
</compile_context>

<pallas_src>
import functools

import jax
import jax.numpy as jnp
from jax.experimental import pallas as pl
from jax.experimental.pallas import tpu as pltpu


def _apply_act(x, act_type):
    if act_type == 'relu':
        return jnp.maximum(x, 0.0)
    if act_type == 'gelu':
        # tanh-form gelu rides the EUP slot instead of a long VPU erf polynomial.
        return jax.nn.gelu(x, approximate=True)
    if act_type == 'sigmoid':
        return jax.nn.sigmoid(x)
    if act_type == 'tanh':
        return jnp.tanh(x)
    if act_type == 'id':
        return x
    raise NotImplementedError(act_type)


# --------------------------------------------------------------------------
# Kernel 1: fused [q|k|v|gin] projection + gout + gating.
# --------------------------------------------------------------------------
def _proj_gate_kernel(x_ref, wqkvg_ref, bqkvg_ref, wgout_ref, bgout_ref,
                      qg_ref, k_ref, v_ref, *, act_type, gate_act, mxu_dtype):
    x = x_ref[0]                                     # (tp, E) f32
    E = x.shape[1]
    xm = x.astype(mxu_dtype)

    # One wide packed projection: [q | k | v | gin] -> (tp, 4E), f32 accumulate.
    proj = jnp.dot(xm, wqkvg_ref[...],
                   preferred_element_type=jnp.float32) + bqkvg_ref[...]
    q = proj[:, 0 * E:1 * E]                         # lane-tile aligned slices
    k = proj[:, 1 * E:2 * E]
    v = proj[:, 2 * E:3 * E]
    hg = _apply_act(proj[:, 3 * E:4 * E], act_type)  # act(gin(x)), f32

    # Second gating linear: g = gout(act(gin(x))).
    g = jnp.dot(hg.astype(mxu_dtype), wgout_ref[...],
                preferred_element_type=jnp.float32) + bgout_ref[...]

    qg = q * g                                       # f32 gating (full vregs)
    if gate_act:
        qg = _apply_act(qg, act_type)

    qg_ref[0] = qg.astype(qg_ref.dtype)
    k_ref[0] = k.astype(k_ref.dtype)
    v_ref[0] = v.astype(v_ref.dtype)


# --------------------------------------------------------------------------
# Kernel 2: flash attention with online softmax (scores never materialized
# beyond one (tq, tk) tile per head; normalization deferred to last KV step).
# --------------------------------------------------------------------------
def _flash_attn_kernel(qg_ref, k_ref, v_ref, o_ref, m_sc, l_sc, acc_sc, *,
                       num_heads, head_dim, mxu_dtype):
    kv = pl.program_id(2)
    H, D = num_heads, head_dim

    @pl.when(kv == 0)
    def _():
        m_sc[...] = jnp.full(m_sc.shape, -jnp.inf, m_sc.dtype)
        l_sc[...] = jnp.zeros(l_sc.shape, l_sc.dtype)
        acc_sc[...] = jnp.zeros(acc_sc.shape, acc_sc.dtype)

    qg = qg_ref[0]                                   # (tq, E) bf16
    k = k_ref[0]                                     # (tk, E) bf16
    v = v_ref[0]                                     # (tk, E) bf16

    for h in range(H):
        lo, hi = h * D, (h + 1) * D
        # QK^T for this head: (tq, D) x (tk, D) contracted on D -> (tq, tk).
        s = jax.lax.dot_general(
            qg[:, lo:hi], k[:, lo:hi],
            (((1,), (1,)), ((), ())),
            preferred_element_type=jnp.float32)

        m_prev = m_sc[:, h:h + 1]                    # (tq, 1)
        m_new = jnp.maximum(m_prev, jnp.max(s, axis=-1, keepdims=True))
        alpha = jnp.exp(m_prev - m_new)              # f32 (v5e-safe)
        p = jnp.exp(s - m_new)                       # f32 probs (unnormalized)

        l_sc[:, h:h + 1] = alpha * l_sc[:, h:h + 1] + jnp.sum(
            p, axis=-1, keepdims=True)
        acc_sc[:, lo:hi] = alpha * acc_sc[:, lo:hi] + jnp.dot(
            p.astype(mxu_dtype), v[:, lo:hi],
            preferred_element_type=jnp.float32)
        m_sc[:, h:h + 1] = m_new

    @pl.when(kv == pl.num_programs(2) - 1)
    def _():
        # Deferred normalization: O(tq*D) per head instead of O(tq*tk).
        for h in range(H):
            lo, hi = h * D, (h + 1) * D
            inv = pl.reciprocal(l_sc[:, h:h + 1], approx=True)
            o_ref[0, :, lo:hi] = (acc_sc[:, lo:hi] * inv).astype(o_ref.dtype)


# --------------------------------------------------------------------------
# Wrapper
# --------------------------------------------------------------------------
def pack_params(params, *, mxu_dtype=jnp.bfloat16):
    """One-time (outside the forward path) weight packing / casting."""
    w_qkvg = jnp.concatenate(
        [params['wq'], params['wk'], params['wv'], params['wgin']],
        axis=1).astype(mxu_dtype)                                    # (E, 4E)
    b_qkvg = jnp.concatenate(
        [params['bq'], params['bk'], params['bv'], params['bgin']]
    )[None, :].astype(jnp.float32)                                   # (1, 4E)
    w_gout = params['wgout'].astype(mxu_dtype)                       # (E, E)
    b_gout = params['bgout'][None, :].astype(jnp.float32)            # (1, E)
    return w_qkvg, b_qkvg, w_gout, b_gout


def ooqkv_attention_g1g(x, packed, *, num_heads, act_type='relu',
                        ooqkv_type='g1g', mxu_dtype=jnp.bfloat16,
                        proj_tile=256, q_tile=256, kv_tile=256,
                        vmem_limit_bytes=64 * 1024 * 1024):
    assert 'g1g' in ooqkv_type
    B, N, E = x.shape
    H = num_heads
    assert E % H == 0, (E, H)
    D = E // H
    w_qkvg, b_qkvg, w_gout, b_gout = packed

    tp = min(proj_tile, N)
    tq = min(q_tile, N)
    tk = min(kv_tile, N)
    assert N % tp == 0 and N % tq == 0 and N % tk == 0, (N, tp, tq, tk)
    gate_act = ('act' in ooqkv_type)

    # ---- kernel 1: fused projection + gating -> bf16 intermediates --------
    proj_kernel = functools.partial(
        _proj_gate_kernel, act_type=act_type, gate_act=gate_act,
        mxu_dtype=mxu_dtype)

    qg, k, v = pl.pallas_call(
        proj_kernel,
        out_shape=(jax.ShapeDtypeStruct((B, N, E), mxu_dtype),
                   jax.ShapeDtypeStruct((B, N, E), mxu_dtype),
                   jax.ShapeDtypeStruct((B, N, E), mxu_dtype)),
        grid_spec=pltpu.PrefetchScalarGridSpec(
            num_scalar_prefetch=0,
            grid=(B, N // tp),
            in_specs=[
                pl.BlockSpec((1, tp, E), lambda b, i: (b, i, 0)),      # x
                # Resident weights/biases: constant index_map + single buffer
                # (nothing to overlap; avoids doubling the (E,4E) block).
                pl.BlockSpec((E, 4 * E), lambda b, i: (0, 0),
                             pipeline_mode=pl.Buffered(1)),
                pl.BlockSpec((1, 4 * E), lambda b, i: (0, 0),
                             pipeline_mode=pl.Buffered(1)),
                pl.BlockSpec((E, E), lambda b, i: (0, 0),
                             pipeline_mode=pl.Buffered(1)),
                pl.BlockSpec((1, E), lambda b, i: (0, 0),
                             pipeline_mode=pl.Buffered(1)),
            ],
            out_specs=(pl.BlockSpec((1, tp, E), lambda b, i: (b, i, 0)),
                       pl.BlockSpec((1, tp, E), lambda b, i: (b, i, 0)),
                       pl.BlockSpec((1, tp, E), lambda b, i: (b, i, 0))),
        ),
        compiler_params=pltpu.CompilerParams(
            dimension_semantics=("parallel", "parallel"),
            vmem_limit_bytes=vmem_limit_bytes),
    )(x, w_qkvg, b_qkvg, w_gout, b_gout)

    # ---- kernel 2: flash attention (online softmax) ------------------------
    attn_kernel = functools.partial(
        _flash_attn_kernel, num_heads=H, head_dim=D, mxu_dtype=mxu_dtype)

    out = pl.pallas_call(
        attn_kernel,
        out_shape=jax.ShapeDtypeStruct((B, N, E), x.dtype),
        grid_spec=pltpu.PrefetchScalarGridSpec(
            num_scalar_prefetch=0,
            grid=(B, N // tq, N // tk),
            in_specs=[
                pl.BlockSpec((1, tq, E), lambda b, qi, ki: (b, qi, 0)),  # qg
                pl.BlockSpec((1, tk, E), lambda b, qi, ki: (b, ki, 0)),  # k
                pl.BlockSpec((1, tk, E), lambda b, qi, ki: (b, ki, 0)),  # v
            ],
            # Output block constant over the KV axis -> accumulator pattern.
            out_specs=pl.BlockSpec((1, tq, E), lambda b, qi, ki: (b, qi, 0)),
            scratch_shapes=[
                pltpu.VMEM((tq, H), jnp.float32),    # running max  m
                pltpu.VMEM((tq, H), jnp.float32),    # running sum  l
                pltpu.VMEM((tq, E), jnp.float32),    # output accumulator
            ]),
        compiler_params=pltpu.CompilerParams(
            dimension_semantics=("parallel", "parallel", "arbitrary"),
            vmem_limit_bytes=vmem_limit_bytes),
    )(qg, k, v)
    return out


# --------------------------------------------------------------------------
# Pure-JAX reference mirroring the PyTorch forward (odeint_method='id').
# --------------------------------------------------------------------------
def ooqkv_attention_g1g_ref(x, params, *, num_heads, act_type='relu',
                            ooqkv_type='g1g'):
    B, N, E = x.shape
    H = num_heads
    D = E // H
    g = _apply_act(x @ params['wgin'] + params['bgin'], act_type)
    g = g @ params['wgout'] + params['bgout']
    q = x @ params['wq'] + params['bq']
    k = x @ params['wk'] + params['bk']
    v = x @ params['wv'] + params['bv']
    q = q.reshape(B, N, H, D).transpose(0, 2, 1, 3)
    k = k.reshape(B, N, H, D).transpose(0, 2, 1, 3)
    v = v.reshape(B, N, H, D).transpose(0, 2, 1, 3)
    g = g.reshape(B, N, H, D).transpose(0, 2, 1, 3)
    qg = q * g
    if 'act' in ooqkv_type:
        qg = _apply_act(qg, act_type)
    att = jnp.einsum('bhnd,bhmd->bhnm', qg, k)
    att = jax.nn.softmax(att, axis=-1)
    out = jnp.einsum('bhnm,bhmd->bhnd', att, v)
    return out.transpose(0, 2, 1, 3).reshape(B, N, E)


def init_params(key, embed_dim):
    """Deterministic synthetic parameters (y = x @ W + b; W == torch weight.T)."""
    E = embed_dim
    ks = jax.random.split(key, 10)
    s = 0.1
    names = ['q', 'k', 'v', 'gin', 'gout']
    params = {}
    for i, n in enumerate(names):
        params['w' + n] = s * jax.random.normal(ks[2 * i], (E, E), jnp.float32)
        params['b' + n] = s * jax.random.normal(ks[2 * i + 1], (E,), jnp.float32)
    return params


if __name__ == "__main__":
    B, N, E, H = 2, 8, 32, 4            # batch, seq, embed_dim, num_heads (D=8)
    act_type = 'relu'
    ooqkv_type = 'g1g'

    key = jax.random.PRNGKey(0)
    kx, kp = jax.random.split(key)
    x = jax.random.normal(kx, (B, N, E), jnp.float32)
    params = init_params(kp, E)

    packed = pack_params(params)        # hoisted out of the forward path

    out = ooqkv_attention_g1g(x, packed, num_heads=H, act_type=act_type,
                              ooqkv_type=ooqkv_type)
    out = jax.block_until_ready(out)

    ref = ooqkv_attention_g1g_ref(x, params, num_heads=H, act_type=act_type,
                                  ooqkv_type=ooqkv_type)
    assert out.shape == (B, N, E), out.shape
    # bf16-at-the-MXU + approx reciprocal -> looser tolerance than pure f32.
    assert jnp.allclose(out, ref, atol=3e-2, rtol=3e-2), \
        float(jnp.max(jnp.abs(out - ref)))

    print("KERNEL_OK")
</pallas_src>

<mosaic_0001>
module attributes {stable_mosaic.version = 11 : i64} {
  func.func @_proj_gate_kernel(%arg0: i32, %arg1: i32, %arg2: memref<1x8x32xf32, #tpu.memory_space<vmem>>, %arg3: memref<32x128xbf16, #tpu.memory_space<vmem>>, %arg4: memref<1x128xf32, #tpu.memory_space<vmem>>, %arg5: memref<32x32xbf16, #tpu.memory_space<vmem>>, %arg6: memref<1x32xf32, #tpu.memory_space<vmem>>, %arg7: memref<1x8x32xbf16, #tpu.memory_space<vmem>>, %arg8: memref<1x8x32xbf16, #tpu.memory_space<vmem>>, %arg9: memref<1x8x32xbf16, #tpu.memory_space<vmem>>) attributes {dimension_semantics = [#tpu.dimension_semantics<parallel>, #tpu.dimension_semantics<parallel>], iteration_bounds = array<i64: 2, 1>, scalar_prefetch = 0 : i64, scratch_operands = 0 : i64, tpu.core_type = #tpu.core_type<tc>, window_params = [{transform_indices = @transform_0, window_bounds = array<i64: 1, 8, 32>}, {pipeline_mode = #tpu.pipeline_mode<synchronous>, transform_indices = @transform_1, window_bounds = array<i64: 32, 128>}, {pipeline_mode = #tpu.pipeline_mode<synchronous>, transform_indices = @transform_2, window_bounds = array<i64: 1, 128>}, {pipeline_mode = #tpu.pipeline_mode<synchronous>, transform_indices = @transform_3, window_bounds = array<i64: 32, 32>}, {pipeline_mode = #tpu.pipeline_mode<synchronous>, transform_indices = @transform_4, window_bounds = array<i64: 1, 32>}, {transform_indices = @transform_5, window_bounds = array<i64: 1, 8, 32>}, {transform_indices = @transform_6, window_bounds = array<i64: 1, 8, 32>}, {transform_indices = @transform_7, window_bounds = array<i64: 1, 8, 32>}]} {
    %c0 = arith.constant 0 : index
    %c0_0 = arith.constant 0 : index
    %c0_1 = arith.constant 0 : index
    %0 = vector.load %arg2[%c0, %c0_0, %c0_1] : memref<1x8x32xf32, #tpu.memory_space<vmem>>, vector<1x8x32xf32>
    %1 = vector.shape_cast %0 : vector<1x8x32xf32> to vector<8x32xf32>
    %2 = arith.truncf %1 : vector<8x32xf32> to vector<8x32xbf16>
    %c0_2 = arith.constant 0 : index
    %c0_3 = arith.constant 0 : index
    %3 = vector.load %arg3[%c0_2, %c0_3] : memref<32x128xbf16, #tpu.memory_space<vmem>>, vector<32x128xbf16>
    %cst = arith.constant dense<0.000000e+00> : vector<8x128xf32>
    %4 = tpu.matmul %2, %3, %cst {dimension_numbers = #tpu.dot_dimension_numbers<[1], [0], [0], [1], [0, 0, 1, 1], [], []>} : vector<8x32xbf16>, vector<32x128xbf16>, vector<8x128xf32> -> vector<8x128xf32>
    %c0_4 = arith.constant 0 : index
    %c0_5 = arith.constant 0 : index
    %5 = vector.load %arg4[%c0_4, %c0_5] : memref<1x128xf32, #tpu.memory_space<vmem>>, vector<1x128xf32>
    %6 = vector.broadcast %5 : vector<1x128xf32> to vector<8x128xf32>
    %7 = arith.addf %4, %6 : vector<8x128xf32>
    %8 = vector.extract_strided_slice %7 {offsets = [0, 0], sizes = [8, 32], strides = [1, 1]} : vector<8x128xf32> to vector<8x32xf32>
    %9 = vector.extract_strided_slice %7 {offsets = [0, 32], sizes = [8, 32], strides = [1, 1]} : vector<8x128xf32> to vector<8x32xf32>
    %10 = vector.extract_strided_slice %7 {offsets = [0, 64], sizes = [8, 32], strides = [1, 1]} : vector<8x128xf32> to vector<8x32xf32>
    %11 = vector.extract_strided_slice %7 {offsets = [0, 96], sizes = [8, 32], strides = [1, 1]} : vector<8x128xf32> to vector<8x32xf32>
    %cst_6 = arith.constant 0.000000e+00 : f32
    %12 = vector.broadcast %cst_6 : f32 to vector<8x32xf32>
    %13 = arith.maximumf %11, %12 : vector<8x32xf32>
    %14 = arith.truncf %13 : vector<8x32xf32> to vector<8x32xbf16>
    %c0_7 = arith.constant 0 : index
    %c0_8 = arith.constant 0 : index
    %15 = vector.load %arg5[%c0_7, %c0_8] : memref<32x32xbf16, #tpu.memory_space<vmem>>, vector<32x32xbf16>
    %cst_9 = arith.constant dense<0.000000e+00> : vector<8x32xf32>
    %16 = tpu.matmul %14, %15, %cst_9 {dimension_numbers = #tpu.dot_dimension_numbers<[1], [0], [0], [1], [0, 0, 1, 1], [], []>} : vector<8x32xbf16>, vector<32x32xbf16>, vector<8x32xf32> -> vector<8x32xf32>
    %c0_10 = arith.constant 0 : index
    %c0_11 = arith.constant 0 : index
    %17 = vector.load %arg6[%c0_10, %c0_11] : memref<1x32xf32, #tpu.memory_space<vmem>>, vector<1x32xf32>
    %18 = vector.broadcast %17 : vector<1x32xf32> to vector<8x32xf32>
    %19 = arith.addf %16, %18 : vector<8x32xf32>
    %20 = arith.mulf %8, %19 : vector<8x32xf32>
    %21 = arith.truncf %20 : vector<8x32xf32> to vector<8x32xbf16>
    %c0_12 = arith.constant 0 : index
    %c0_13 = arith.constant 0 : index
    %c0_14 = arith.constant 0 : index
    %22 = vector.load %arg7[%c0_12, %c0_13, %c0_14] : memref<1x8x32xbf16, #tpu.memory_space<vmem>>, vector<1x8x32xbf16>
    %23 = vector.shape_cast %22 : vector<1x8x32xbf16> to vector<8x32xbf16>
    %24 = vector.shape_cast %21 : vector<8x32xbf16> to vector<1x8x32xbf16>
    tpu.vector_store %arg7[%c0_12, %c0_13, %c0_14], %24 {strides = array<i32>} : memref<1x8x32xbf16, #tpu.memory_space<vmem>>, vector<1x8x32xbf16>,
    %25 = arith.truncf %9 : vector<8x32xf32> to vector<8x32xbf16>
    %c0_15 = arith.constant 0 : index
    %c0_16 = arith.constant 0 : index
    %c0_17 = arith.constant 0 : index
    %26 = vector.load %arg8[%c0_15, %c0_16, %c0_17] : memref<1x8x32xbf16, #tpu.memory_space<vmem>>, vector<1x8x32xbf16>
    %27 = vector.shape_cast %26 : vector<1x8x32xbf16> to vector<8x32xbf16>
    %28 = vector.shape_cast %25 : vector<8x32xbf16> to vector<1x8x32xbf16>
    tpu.vector_store %arg8[%c0_15, %c0_16, %c0_17], %28 {strides = array<i32>} : memref<1x8x32xbf16, #tpu.memory_space<vmem>>, vector<1x8x32xbf16>,
    %29 = arith.truncf %10 : vector<8x32xf32> to vector<8x32xbf16>
    %c0_18 = arith.constant 0 : index
    %c0_19 = arith.constant 0 : index
    %c0_20 = arith.constant 0 : index
    %30 = vector.load %arg9[%c0_18, %c0_19, %c0_20] : memref<1x8x32xbf16, #tpu.memory_space<vmem>>, vector<1x8x32xbf16>
    %31 = vector.shape_cast %30 : vector<1x8x32xbf16> to vector<8x32xbf16>
    %32 = vector.shape_cast %29 : vector<8x32xbf16> to vector<1x8x32xbf16>
    tpu.vector_store %arg9[%c0_18, %c0_19, %c0_20], %32 {strides = array<i32>} : memref<1x8x32xbf16, #tpu.memory_space<vmem>>, vector<1x8x32xbf16>,
    return
  }
  func.func @transform_0(%arg0: i32, %arg1: i32) -> (i32, i32, i32) {
    %c0_i32 = arith.constant 0 : i32
    %c0_i32_0 = arith.constant 0 : i32
    return %arg0, %arg1, %c0_i32 : i32, i32, i32
  }
  func.func @transform_1(%arg0: i32, %arg1: i32) -> (i32, i32) {
    %c0_i32 = arith.constant 0 : i32
    %c0_i32_0 = arith.constant 0 : i32
    %c0_i32_1 = arith.constant 0 : i32
    return %c0_i32, %c0_i32_0 : i32, i32
  }
  func.func @transform_2(%arg0: i32, %arg1: i32) -> (i32, i32) {
    %c0_i32 = arith.constant 0 : i32
    %c0_i32_0 = arith.constant 0 : i32
    %c0_i32_1 = arith.constant 0 : i32
    return %c0_i32, %c0_i32_0 : i32, i32
  }
  func.func @transform_3(%arg0: i32, %arg1: i32) -> (i32, i32) {
    %c0_i32 = arith.constant 0 : i32
    %c0_i32_0 = arith.constant 0 : i32
    %c0_i32_1 = arith.constant 0 : i32
    return %c0_i32, %c0_i32_0 : i32, i32
  }
  func.func @transform_4(%arg0: i32, %arg1: i32) -> (i32, i32) {
    %c0_i32 = arith.constant 0 : i32
    %c0_i32_0 = arith.constant 0 : i32
    %c0_i32_1 = arith.constant 0 : i32
    return %c0_i32, %c0_i32_0 : i32, i32
  }
  func.func @transform_5(%arg0: i32, %arg1: i32) -> (i32, i32, i32) {
    %c0_i32 = arith.constant 0 : i32
    %c0_i32_0 = arith.constant 0 : i32
    return %arg0, %arg1, %c0_i32 : i32, i32, i32
  }
  func.func @transform_6(%arg0: i32, %arg1: i32) -> (i32, i32, i32) {
    %c0_i32 = arith.constant 0 : i32
    %c0_i32_0 = arith.constant 0 : i32
    return %arg0, %arg1, %c0_i32 : i32, i32, i32
  }
  func.func @transform_7(%arg0: i32, %arg1: i32) -> (i32, i32, i32) {
    %c0_i32 = arith.constant 0 : i32
    %c0_i32_0 = arith.constant 0 : i32
    return %arg0, %arg1, %c0_i32 : i32, i32, i32
  }
}

</mosaic_0001>

<llo_original>
// kernel: tpu_custom_call.1
$region0: #{tpu_custom_call.1}
  #allocation0 [shape = 'u32[]', space=smem, size = 0x4, offset = 0x4, fixed_abs, tag = 'smem constant byte address 0x4 - core index']
  #allocation1 [shape = 'u32[144,128]{1,0:T(1,128)}', space=vmem, size = 0x12000, scoped, tag = 'internal scratch']
  %s0 = inlined_call_operand.hbm [shape: f32[2,8,32], index: 0, kind: input, shape index: {}]
  %s1 = inlined_call_operand.hbm [shape: bf16[32,128], index: 1, kind: input, shape index: {}]
  %s2 = inlined_call_operand.vmem [shape: f32[1,128], index: 2, kind: input, shape index: {}]
  %s3 = inlined_call_operand.hbm [shape: bf16[32,32], index: 3, kind: input, shape index: {}]
  %s4 = inlined_call_operand.vmem [shape: f32[1,32], index: 4, kind: input, shape index: {}]
  %s5 = inlined_call_operand.hbm [shape: bf16[2,8,32], index: 5, kind: output, shape index: {0}]
  %s6 = inlined_call_operand.hbm [shape: bf16[2,8,32], index: 6, kind: output, shape index: {1}]
  %s7 = inlined_call_operand.hbm [shape: bf16[2,8,32], index: 7, kind: output, shape index: {2}]
  %8 = xla_tuple %s5, %s6, %s7
  %s9 = sld [smem:[#allocation0]]
  $region81: #{tpu_custom_call.1} parent=0
    _
  %s11 = ssub.s32 1, %s9
  %s12 = scalar_select 0, %s11, %s9
  $region1: #{tpu_custom_call.1} parent=0
    #allocation2 [shape = 'u8[8192]{0}', space=vmem, size = 0x2000, scoped, tag = 'input window, operand 0']
    #allocation3 [shape = 's32[2]{0}', space=sflag, size = 0x8, scoped, tag = 'scoped memory for tpu_custom_call.1']
    #allocation4 [shape = 's32[2]{0}', space=sflag, size = 0x8, scoped, tag = 'scoped memory for tpu_custom_call.1']
    #allocation5 [shape = 'u8[8192]{0}', space=vmem, size = 0x2000, scoped, tag = 'input window, operand 1, single buffered']
    #allocation6 [shape = 's32[1]{0}', space=sflag, size = 0x4, scoped, tag = 'scoped memory for tpu_custom_call.1']
    #allocation7 [shape = 'u8[8192]{0}', space=vmem, size = 0x2000, scoped, tag = 'input window, operand 3, single buffered']
    #allocation8 [shape = 'u8[4096]{0}', space=vmem, size = 0x1000, scoped, tag = 'output window, operand 0']
    #allocation9 [shape = 'u8[4096]{0}', space=vmem, size = 0x1000, scoped, tag = 'output window, operand 1']
    #allocation10 [shape = 's32[2]{0}', space=sflag, size = 0x8, scoped, tag = 'scoped memory for tpu_custom_call.1']
    #allocation11 [shape = 'u8[4096]{0}', space=vmem, size = 0x1000, scoped, tag = 'output window, operand 2']
    %13 = vsyncpa [#allocation3], 0
    %s14 = scalar_lea.sflag [#allocation3], 1
    %15 = vsyncpa %s14, 0
    %16 = vsyncpa [#allocation6], 0
    %17 = vsyncpa [#allocation4], 0
    %s18 = scalar_lea.sflag [#allocation4], 1
    %19 = vsyncpa %s18, 0
    %20 = vsyncpa [#allocation10], 0
    %s21 = scalar_lea.sflag [#allocation10], 1
    %22 = vsyncpa %s21, 0
    loop: start=0, step=1, limit=4
    $region2: #{tpu_custom_call.1} parent=1 // loop_pre_header
      _
    $region3: #{tpu_custom_call.1} parent=1 // loop_header
      %s24 = sphi 0, %s28
      %p25 = scmp.ge.s32.totalorder %s24, 4
      %s31 = sphi 0, %s43
      %s32 = sphi 0, %s39
      %s33 = sphi 0, %s31
      %s34 = sphi 0, %s32
      %s35 = sphi 0, %s33
      %s36 = sphi 0, %s34
      %s48 = sphi 0, %s50
      %s51 = sphi 0, %s48
      %s52 = sphi 0, %s51
      %s68 = sphi 0, %s52
      %s72 = sphi 0, %s72
      %s74 = sphi 0, %s72
      %s75 = sphi 0, %s74
      %s89 = sphi 0, %s75
      %s93 = sphi 0, %s93
      %s95 = sphi 0, %s93
      %s96 = sphi 0, %s95
      %s110 = sphi 0, %s96
      %s114 = sphi 0, %s114
      %s116 = sphi 0, %s114
      %s117 = sphi 0, %s116
      %s131 = sphi 0, %s117
      %s135 = sphi 0, %s135
      %s137 = sphi 0, %s135
      %s138 = sphi 0, %s137
      %s152 = sphi 0, %s138
      %s160 = sphi 0, %s162
      %s163 = sphi 0, %s160
      %s164 = sphi 0, %s163
      %s180 = sphi 0, %s164
      %s188 = sphi 0, %s190
      %s191 = sphi 0, %s188
      %s192 = sphi 0, %s191
      %s208 = sphi 0, %s192
      %s216 = sphi 0, %s218
      %s219 = sphi 0, %s216
      %s220 = sphi 0, %s219
      %s236 = sphi 0, %s220
    $region4: #{tpu_custom_call.1} parent=1 // loop_header_branch
      %27 = sbr.rel (%p25) target = $region8
    $region5: #{tpu_custom_call.1} parent=1 // loop_body
      %s29 = ssub.s32 %s24, 1
      %s30 = ssub.s32 %s24, 2
      %s37 = sadd.s32 1, %s32
      %p38 = scmp.ge.s32.totalorder %s37, 1
      %s39 = scalar_select %p38, 0, %s37
      %s40 = sadd.s32 1, %s31
      %s41 = scalar_select %p38, %s40, %s31
      %p42 = scmp.ge.s32.totalorder %s41, 2
      %s43 = scalar_select %p42, 0, %s41
      %s44 = ssub.s32 %s31, %s43
      %s45 = ssub.s32 %s32, %s39
      %s46 = sor.u32 %s44, %s45
      %p47 = scmp.eq.s32.totalorder %s46, 0
      %s49 = sadd.s32 %s48, 1
      %s50 = scalar_select %p47, %s48, %s49
      %p53 = pneg %p47
      %p54 = scmp.eq.s32.totalorder %s24, 1
      %p55 = por %p53, %p54
      %p56 = scmp.ne.s32.totalorder %s48, %s51
      %p57 = scmp.eq.s32.totalorder %s24, 0
      %p58 = por %p56, %p57
      %p59 = scmp.ne.s32.totalorder %s48, %s51
      %p60 = scmp.eq.s32.totalorder %s29, 1
      %p61 = por %p59, %p60
      %p62 = scmp.ne.s32.totalorder %s51, %s52
      %p63 = scmp.eq.s32.totalorder %s29, 0
      %p64 = por %p62, %p63
      %p65 = scmp.ne.s32.totalorder %s51, %s52
      %p66 = scmp.eq.s32.totalorder %s30, 1
      %p67 = por %p65, %p66
      %p69 = scmp.ne.s32.totalorder %s52, %s68
      %p70 = scmp.eq.s32.totalorder %s30, 0
      %p71 = por %p69, %p70
      %s73 = sadd.s32 %s72, 1
      %p76 = scmp.eq.s32.totalorder %s24, 1
      %p77 = scmp.ne.s32.totalorder %s72, %s74
      %p78 = scmp.eq.s32.totalorder %s24, 0
      %p79 = por %p77, %p78
      %p80 = scmp.ne.s32.totalorder %s72, %s74
      %p81 = scmp.eq.s32.totalorder %s29, 1
      %p82 = por %p80, %p81
      %p83 = scmp.ne.s32.totalorder %s74, %s75
      %p84 = scmp.eq.s32.totalorder %s29, 0
      %p85 = por %p83, %p84
      %p86 = scmp.ne.s32.totalorder %s74, %s75
      %p87 = scmp.eq.s32.totalorder %s30, 1
      %p88 = por %p86, %p87
      %p90 = scmp.ne.s32.totalorder %s75, %s89
      %p91 = scmp.eq.s32.totalorder %s30, 0
      %p92 = por %p90, %p91
      %s94 = sadd.s32 %s93, 1
      %p97 = scmp.eq.s32.totalorder %s24, 1
      %p98 = scmp.ne.s32.totalorder %s93, %s95
      %p99 = scmp.eq.s32.totalorder %s24, 0
      %p100 = por %p98, %p99
      %p101 = scmp.ne.s32.totalorder %s93, %s95
      %p102 = scmp.eq.s32.totalorder %s29, 1
      %p103 = por %p101, %p102
      %p104 = scmp.ne.s32.totalorder %s95, %s96
      %p105 = scmp.eq.s32.totalorder %s29, 0
      %p106 = por %p104, %p105
      %p107 = scmp.ne.s32.totalorder %s95, %s96
      %p108 = scmp.eq.s32.totalorder %s30, 1
      %p109 = por %p107, %p108
      %p111 = scmp.ne.s32.totalorder %s96, %s110
      %p112 = scmp.eq.s32.totalorder %s30, 0
      %p113 = por %p111, %p112
      %s115 = sadd.s32 %s114, 1
      %p118 = scmp.eq.s32.totalorder %s24, 1
      %p119 = scmp.ne.s32.totalorder %s114, %s116
      %p120 = scmp.eq.s32.totalorder %s24, 0
      %p121 = por %p119, %p120
      %p122 = scmp.ne.s32.totalorder %s114, %s116
      %p123 = scmp.eq.s32.totalorder %s29, 1
      %p124 = por %p122, %p123
      %p125 = scmp.ne.s32.totalorder %s116, %s117
      %p126 = scmp.eq.s32.totalorder %s29, 0
      %p127 = por %p125, %p126
      %p128 = scmp.ne.s32.totalorder %s116, %s117
      %p129 = scmp.eq.s32.totalorder %s30, 1
      %p130 = por %p128, %p129
      %p132 = scmp.ne.s32.totalorder %s117, %s131
      %p133 = scmp.eq.s32.totalorder %s30, 0
      %p134 = por %p132, %p133
      %s136 = sadd.s32 %s135, 1
      %p139 = scmp.eq.s32.totalorder %s24, 1
      %p140 = scmp.ne.s32.totalorder %s135, %s137
      %p141 = scmp.eq.s32.totalorder %s24, 0
      %p142 = por %p140, %p141
      %p143 = scmp.ne.s32.totalorder %s135, %s137
      %p144 = scmp.eq.s32.totalorder %s29, 1
      %p145 = por %p143, %p144
      %p146 = scmp.ne.s32.totalorder %s137, %s138
      %p147 = scmp.eq.s32.totalorder %s29, 0
      %p148 = por %p146, %p147
      %p149 = scmp.ne.s32.totalorder %s137, %s138
      %p150 = scmp.eq.s32.totalorder %s30, 1
      %p151 = por %p149, %p150
      %p153 = scmp.ne.s32.totalorder %s138, %s152
      %p154 = scmp.eq.s32.totalorder %s30, 0
      %p155 = por %p153, %p154
      %s156 = ssub.s32 %s31, %s43
      %s157 = ssub.s32 %s32, %s39
      %s158 = sor.u32 %s156, %s157
      %p159 = scmp.eq.s32.totalorder %s158, 0
      %s161 = sadd.s32 %s160, 1
      %s162 = scalar_select %p159, %s160, %s161
      %p165 = pneg %p159
      %p166 = scmp.eq.s32.totalorder %s24, 1
      %p167 = por %p165, %p166
      %p168 = scmp.ne.s32.totalorder %s160, %s163
      %p169 = scmp.eq.s32.totalorder %s24, 0
      %p170 = por %p168, %p169
      %p171 = scmp.ne.s32.totalorder %s160, %s163
      %p172 = scmp.eq.s32.totalorder %s29, 1
      %p173 = por %p171, %p172
      %p174 = scmp.ne.s32.totalorder %s163, %s164
      %p175 = scmp.eq.s32.totalorder %s29, 0
      %p176 = por %p174, %p175
      %p177 = scmp.ne.s32.totalorder %s163, %s164
      %p178 = scmp.eq.s32.totalorder %s30, 1
      %p179 = por %p177, %p178
      %p181 = scmp.ne.s32.totalorder %s164, %s180
      %p182 = scmp.eq.s32.totalorder %s30, 0
      %p183 = por %p181, %p182
      %s184 = ssub.s32 %s31, %s43
      %s185 = ssub.s32 %s32, %s39
      %s186 = sor.u32 %s184, %s185
      %p187 = scmp.eq.s32.totalorder %s186, 0
      %s189 = sadd.s32 %s188, 1
      %s190 = scalar_select %p187, %s188, %s189
      %p193 = pneg %p187
      %p194 = scmp.eq.s32.totalorder %s24, 1
      %p195 = por %p193, %p194
      %p196 = scmp.ne.s32.totalorder %s188, %s191
      %p197 = scmp.eq.s32.totalorder %s24, 0
      %p198 = por %p196, %p197
      %p199 = scmp.ne.s32.totalorder %s188, %s191
      %p200 = scmp.eq.s32.totalorder %s29, 1
      %p201 = por %p199, %p200
      %p202 = scmp.ne.s32.totalorder %s191, %s192
      %p203 = scmp.eq.s32.totalorder %s29, 0
      %p204 = por %p202, %p203
      %p205 = scmp.ne.s32.totalorder %s191, %s192
      %p206 = scmp.eq.s32.totalorder %s30, 1
      %p207 = por %p205, %p206
      %p209 = scmp.ne.s32.totalorder %s192, %s208
      %p210 = scmp.eq.s32.totalorder %s30, 0
      %p211 = por %p209, %p210
      %s212 = ssub.s32 %s31, %s43
      %s213 = ssub.s32 %s32, %s39
      %s214 = sor.u32 %s212, %s213
      %p215 = scmp.eq.s32.totalorder %s214, 0
      %s217 = sadd.s32 %s216, 1
      %s218 = scalar_select %p215, %s216, %s217
      %p221 = pneg %p215
      %p222 = scmp.eq.s32.totalorder %s24, 1
      %p223 = por %p221, %p222
      %p224 = scmp.ne.s32.totalorder %s216, %s219
      %p225 = scmp.eq.s32.totalorder %s24, 0
      %p226 = por %p224, %p225
      %p227 = scmp.ne.s32.totalorder %s216, %s219
      %p228 = scmp.eq.s32.totalorder %s29, 1
      %p229 = por %p227, %p228
      %p230 = scmp.ne.s32.totalorder %s219, %s220
      %p231 = scmp.eq.s32.totalorder %s29, 0
      %p232 = por %p230, %p231
      %p233 = scmp.ne.s32.totalorder %s219, %s220
      %p234 = scmp.eq.s32.totalorder %s30, 1
      %p235 = por %p233, %p234
      %p237 = scmp.ne.s32.totalorder %s220, %s236
      %p238 = scmp.eq.s32.totalorder %s30, 0
      %p239 = por %p237, %p238
      %p240 = scmp.le.s32.totalorder 1, %s24
      %p241 = scmp.lt.s32.totalorder %s24, 3
      %p242 = pnand %p240, %p241
      %p243 = pneg %p242
      // Predicated region
      $region9: #{tpu_custom_call.1} parent=5 // pred_check
        _
      $region10: #{tpu_custom_call.1} parent=5 // pred_check_branch
        %245 = sbr.rel (%p242) target = $region12
      $region11: #{tpu_custom_call.1} parent=5 // pred_region
        %s246 = ssub.s32 %s24, 1
        // Predicated region
        $region13: #{tpu_custom_call.1} parent=11 // pred_check
          %p247 = pneg %p85
        $region14: #{tpu_custom_call.1} parent=11 // pred_check_branch
          %249 = sbr.rel (%p247) target = $region16
        $region15: #{tpu_custom_call.1} parent=11 // pred_region
          %s251 = ssub.s32 256, 256
          %252 = vsyncadd [#allocation6], %s251
          %s253 = sshll.u32 [#allocation5], 4
          %s254 = int_to_ptr.vmem [resolvable:$true] %s253
          %259 = dma.hbm_to_vmem [thread:$0]  %s1, 256, %s254, [#allocation6], 64, 64, 4
        $region16: #{tpu_custom_call.1} parent=11 // pred_fallthru
          _
        // Predicated region
        $region17: #{tpu_custom_call.1} parent=11 // pred_check
          %p260 = pneg %p106
        $region18: #{tpu_custom_call.1} parent=11 // pred_check_branch
          %262 = sbr.rel (%p260) target = $region20
        $region19: #{tpu_custom_call.1} parent=11 // pred_region
          _
        $region20: #{tpu_custom_call.1} parent=11 // pred_fallthru
          _
        // Predicated region
        $region21: #{tpu_custom_call.1} parent=11 // pred_check
          %p263 = pneg %p127
        $region22: #{tpu_custom_call.1} parent=11 // pred_check_branch
          %265 = sbr.rel (%p263) target = $region24
        $region23: #{tpu_custom_call.1} parent=11 // pred_region
          %s267 = ssub.s32 256, 256
          %268 = vsyncadd [#allocation6], %s267
          %s269 = sshll.u32 [#allocation7], 4
          %s270 = int_to_ptr.vmem [resolvable:$true] %s269
          %275 = dma.hbm_to_vmem [thread:$0]  %s3, 256, %s270, [#allocation6], 64, 64, 4
        $region24: #{tpu_custom_call.1} parent=11 // pred_fallthru
          _
        // Predicated region
        $region25: #{tpu_custom_call.1} parent=11 // pred_check
          %p276 = pneg %p148
        $region26: #{tpu_custom_call.1} parent=11 // pred_check_branch
          %278 = sbr.rel (%p276) target = $region28
        $region27: #{tpu_custom_call.1} parent=11 // pred_region
          _
        $region28: #{tpu_custom_call.1} parent=11 // pred_fallthru
          _
      $region12: #{tpu_custom_call.1} parent=5 // pred_fallthru
        _
      %p279 = scmp.lt.s32.totalorder %s24, 2
      // Predicated region
      $region29: #{tpu_custom_call.1} parent=5 // pred_check
        %p280 = pneg %p279
      $region30: #{tpu_custom_call.1} parent=5 // pred_check_branch
        %282 = sbr.rel (%p280) target = $region32
      $region31: #{tpu_custom_call.1} parent=5 // pred_region
        // Predicated region
        $region33: #{tpu_custom_call.1} parent=31 // pred_check
          %p283 = pneg %p58
        $region34: #{tpu_custom_call.1} parent=31 // pred_check_branch
          %285 = sbr.rel (%p283) target = $region36
        $region35: #{tpu_custom_call.1} parent=31 // pred_region
          %s286 = sand.u32 %s48, 1
          %s287 = scalar_lea.sflag [#allocation3], %s286
          %s288 = sand.u32 %s48, 1
          %s289 = smul.addr %s288, 8
          %s290 = scalar_lea.vmem [#allocation2], %s289
          %s292 = ssub.s32 128, 128
          %293 = vsyncadd %s287, %s292
          %s294 = sadd.s32 %s32, %s31
          %s295 = smul.addr %s294, 128
          %s296 = scalar_lea.hbm %s0, %s295
          %s298 = sshll.u32 %s290, 4
          %s299 = int_to_ptr.vmem [resolvable:$true] %s298
          %301 = dma.hbm_to_vmem [thread:$0]  %s296, 128, %s299, %s287
        $region36: #{tpu_custom_call.1} parent=31 // pred_fallthru
          _
      $region32: #{tpu_custom_call.1} parent=5 // pred_fallthru
        _
      %p302 = scmp.le.s32.totalorder 1, %s24
      %p303 = scmp.lt.s32.totalorder %s24, 3
      %p304 = pnand %p302, %p303
      %p305 = pneg %p304
      // Predicated region
      $region37: #{tpu_custom_call.1} parent=5 // pred_check
        _
      $region38: #{tpu_custom_call.1} parent=5 // pred_check_branch
        %307 = sbr.rel (%p304) target = $region40
      $region39: #{tpu_custom_call.1} parent=5 // pred_region
        %s308 = ssub.s32 %s24, 1
        %s309 = sand.u32 %s51, 1
        %s310 = scalar_lea.sflag [#allocation3], %s309
        %s311 = sand.u32 %s51, 1
        %s312 = smul.addr %s311, 8
        %s313 = scalar_lea.vmem [#allocation2], %s312
        // Predicated region
        $region41: #{tpu_custom_call.1} parent=39 // pred_check
          %p314 = pneg %p64
        $region42: #{tpu_custom_call.1} parent=39 // pred_check_branch
          %316 = sbr.rel (%p314) target = $region44
        $region43: #{tpu_custom_call.1} parent=39 // pred_region
          %317 = dma.done %s310, 128
        $region44: #{tpu_custom_call.1} parent=39 // pred_fallthru
          _
        // Predicated region
        $region45: #{tpu_custom_call.1} parent=39 // pred_check
          %p318 = pneg %p85
        $region46: #{tpu_custom_call.1} parent=39 // pred_check_branch
          %320 = sbr.rel (%p318) target = $region48
        $region47: #{tpu_custom_call.1} parent=39 // pred_region
          %321 = dma.done [#allocation6], 256
        $region48: #{tpu_custom_call.1} parent=39 // pred_fallthru
          _
        // Predicated region
        $region49: #{tpu_custom_call.1} parent=39 // pred_check
          %p322 = pneg %p127
        $region50: #{tpu_custom_call.1} parent=39 // pred_check_branch
          %324 = sbr.rel (%p322) target = $region52
        $region51: #{tpu_custom_call.1} parent=39 // pred_region
          %325 = dma.done [#allocation6], 256
        $region52: #{tpu_custom_call.1} parent=39 // pred_fallthru
          _
        %s326 = sand.u32 %s51, 1
        %s327 = scalar_lea.sflag [#allocation3], %s326
        %s328 = sand.u32 %s51, 1
        %s329 = smul.addr %s328, 8
        %s330 = scalar_lea.vmem [#allocation2], %s329
        %p331 = pneg %p64
        %p332 = pneg %p61
        %p333 = pneg %p85
        %p334 = pneg %p82
        %p335 = pneg %p106
        %p336 = pneg %p103
        %p337 = pneg %p127
        %p338 = pneg %p124
        %p339 = pneg %p148
        %p340 = pneg %p145
        %p341 = pneg %p176
        %p342 = pneg %p173
        %s343 = sand.u32 %s163, 1
        %s344 = scalar_lea.sflag [#allocation4], %s343
        %s345 = sand.u32 %s163, 1
        %s346 = smul.addr %s345, 4
        %s347 = scalar_lea.vmem [#allocation8], %s346
        %p348 = pneg %p204
        %p349 = pneg %p201
        %s350 = sand.u32 %s29, 1
        %s351 = scalar_lea.sflag [#allocation10], %s350
        %s352 = sand.u32 %s191, 1
        %s353 = smul.addr %s352, 4
        %s354 = scalar_lea.vmem [#allocation9], %s353
        %p355 = pneg %p232
        %p356 = pneg %p229
        %s357 = sand.u32 %s29, 1
        %s358 = scalar_lea.sflag [#allocation10], %s357
        %s359 = sand.u32 %s219, 1
        %s360 = smul.addr %s359, 4
        %s361 = scalar_lea.vmem [#allocation11], %s360
        %v363 = vld [vmem:[%s313] sm:$0xff]
        %v364 = vpack.c.bf16 %v363, %v363
        %v365 = vld [vmem:[#allocation5] sm:$0xf]
        %v366 = vld [vmem:[#allocation5 + $0x4] sm:$0xf]
        %v367 = vld [vmem:[#allocation5 + $0x8] sm:$0xf]
        %v368 = vld [vmem:[#allocation5 + $0xc] sm:$0xf]
        %v369 = vld [vmem:[%s2] sm:$0x1]
        %v371 = vlaneseq
        %v372 = vshrl.u32 %v371, 7
        %v373 = vsub.s32 0, %v372
        %v374 = vrot.slane %v369, %v373
        %v380 = vunpack.c.l.b16 %v365
        %v381 = vunpack.c.l.b16 %v366
        %v382 = vunpack.c.l.b16 %v367
        %v383 = vunpack.c.l.b16 %v368
        %v384 = vpack.c.b16 %v381, %v380
        %v385 = vpack.c.b16 %v383, %v382
        %vm388 = vcmask 261120
        %v390 = vsel %vm388, %v364, 0
        %392 = vmatprep.subr.bf16.mxu0 0
        %393 = vmatpush1.bf16.msra.mxu0 0
        %394 = vmatprep.subr.bf16.mxu0 0
        %395 = vmatpush1.bf16.msra.mxu0 0
        %396 = vmatprep.subr.bf16.mxu0 0
        %397 = vmatpush1.bf16.msra.mxu0 0
        %398 = vmatprep.subr.bf16.mxu0 0
        %399 = vmatpush1.bf16.msra.mxu0 0
        %400 = vmatprep.subr.bf16.mxu0 0
        %401 = vmatpush1.bf16.msra.mxu0 0
        %402 = vmatprep.subr.bf16.mxu0 0
        %403 = vmatpush1.bf16.msra.mxu0 0
        %404 = vmatprep.subr.bf16.mxu0 0
        %405 = vmatpush1.bf16.msra.mxu0 %v385
        %406 = vmatprep.subr.bf16.mxu0 0
        %407 = vmatpush1.bf16.msra.mxu0 %v384
        %408 = vmatprep.subr.bf16.mxu0 0
        %409 = vmatpush2.bf16.msra.mxu0 0
        %410 = vmatprep.subr.bf16.mxu0 0
        %411 = vmatpush2.bf16.msra.mxu0 0
        %412 = vmatprep.subr.bf16.mxu0 0
        %413 = vmatpush2.bf16.msra.mxu0 0
        %414 = vmatprep.subr.bf16.mxu0 0
        %415 = vmatpush2.bf16.msra.mxu0 0
        %416 = vmatprep.subr.bf16.mxu0 0
        %417 = vmatpush2.bf16.msra.mxu0 0
        %418 = vmatprep.subr.bf16.mxu0 0
        %419 = vmatpush2.bf16.msra.mxu0 0
        %420 = vmatprep.subr.bf16.mxu0 0
        %421 = vmatpush2.bf16.msra.mxu0 0
        %422 = vmatprep.subr.bf16.mxu0 0
        %423 = vmatpush2.bf16.msra.mxu0 0
        %424 = vmatprep.mubr.bf16.mxu0 0
        %425 = vmatmul.mubr.bf16.gmra.mxu0 %v390
        %v426 = vpop.f32.mrf.mxu0
        %v427 = vadd.f32 %v374, %v426
        %v428 = vpop.f32.mrf.mxu0
        %v429 = vpop.f32.mrf.mxu0
        %v430 = vpop.f32.mrf.mxu0
        %431 = vdwg.mxu0
        %v432 = vmax.f32 %v427, 0.0
        %v433 = vpack.c.bf16 %v432, %v432
        %v434 = vld [vmem:[#allocation7] sm:$0xf]
        %v435 = vld [vmem:[#allocation7 + $0x4] sm:$0xf]
        %v436 = vld [vmem:[#allocation7 + $0x8] sm:$0xf]
        %v437 = vld [vmem:[#allocation7 + $0xc] sm:$0xf]
        %v438 = vld [vmem:[%s4] sm:$0x1]
        %v440 = vlaneseq
        %v441 = vshrl.u32 %v440, 7
        %v442 = vsub.s32 0, %v441
        %v443 = vrot.slane %v438, %v442
        %446 = vrot.lane.b32.xlu0 %v433, 32
        %v447 = vpop.permute.xlu0 %446
        %v452 = vunpack.c.l.b16 %v434
        %v453 = vunpack.c.l.b16 %v435
        %v454 = vunpack.c.l.b16 %v436
        %v455 = vunpack.c.l.b16 %v437
        %v456 = vpack.c.b16 %v453, %v452
        %v457 = vpack.c.b16 %v455, %v454
        %v461 = vsel %vm388, %v447, 0
        %463 = vmatprep.subr.bf16.mxu0 0
        %464 = vmatpush1.bf16.msra.mxu0 0
        %465 = vmatprep.subr.bf16.mxu0 0
        %466 = vmatpush1.bf16.msra.mxu0 0
        %467 = vmatprep.subr.bf16.mxu0 0
        %468 = vmatpush1.bf16.msra.mxu0 0
        %469 = vmatprep.subr.bf16.mxu0 0
        %470 = vmatpush1.bf16.msra.mxu0 0
        %471 = vmatprep.subr.bf16.mxu0 0
        %472 = vmatpush1.bf16.msra.mxu0 0
        %473 = vmatprep.subr.bf16.mxu0 0
        %474 = vmatpush1.bf16.msra.mxu0 0
        %475 = vmatprep.subr.bf16.mxu0 0
        %476 = vmatpush1.bf16.msra.mxu0 %v457
        %477 = vmatprep.subr.bf16.mxu0 0
        %478 = vmatpush1.bf16.msra.mxu0 %v456
        %479 = vmatprep.subr.bf16.mxu0 0
        %480 = vmatpush2.bf16.msra.mxu0 0
        %481 = vmatprep.subr.bf16.mxu0 0
        %482 = vmatpush2.bf16.msra.mxu0 0
        %483 = vmatprep.subr.bf16.mxu0 0
        %484 = vmatpush2.bf16.msra.mxu0 0
        %485 = vmatprep.subr.bf16.mxu0 0
        %486 = vmatpush2.bf16.msra.mxu0 0
        %487 = vmatprep.subr.bf16.mxu0 0
        %488 = vmatpush2.bf16.msra.mxu0 0
        %489 = vmatprep.subr.bf16.mxu0 0
        %490 = vmatpush2.bf16.msra.mxu0 0
        %491 = vmatprep.subr.bf16.mxu0 0
        %492 = vmatpush2.bf16.msra.mxu0 0
        %493 = vmatprep.subr.bf16.mxu0 0
        %494 = vmatpush2.bf16.msra.mxu0 0
        %495 = vmatprep.mubr.bf16.mxu0 0
        %496 = vmatmul.mubr.bf16.gmra.mxu0 %v461
        %v497 = vpop.f32.mrf.mxu0
        %v498 = vadd.f32 %v443, %v497
        %v499 = vpop.f32.mrf.mxu0
        %v500 = vpop.f32.mrf.mxu0
        %v501 = vpop.f32.mrf.mxu0
        %502 = vdwg.mxu0
        %v503 = vmul.f32 %v427, %v498
        %v504 = vpack.c.bf16 %v503, %v503
        %vm505 = vcmask 257024
        %506 = vst.msk [vmem:[%s347] sm:$0xf] %vm505, %v504
        %v507 = vpack.c.bf16 %v427, %v427
        %v509 = vunpack.c.l.b16 %v507
        %v510 = vpack.c.b16 %v509, %v509
        %511 = vrot.lane.b32.xlu0 %v510, 96
        %v512 = vpop.permute.xlu0 %511
        %514 = vst.msk [vmem:[%s354] sm:$0xf] %vm505, %v512
        %515 = vrot.lane.b32.xlu0 %v510, 64
        %v516 = vpop.permute.xlu0 %515
        %518 = vst.msk [vmem:[%s361] sm:$0xf] %vm505, %v516
        %s519 = sand.u32 %s163, 1
        %s520 = scalar_lea.sflag [#allocation4], %s519
        %s521 = sand.u32 %s163, 1
        %s522 = smul.addr %s521, 4
        %s523 = scalar_lea.vmem [#allocation8], %s522
        %s524 = sand.u32 %s29, 1
        %s525 = scalar_lea.sflag [#allocation10], %s524
        %s526 = sand.u32 %s191, 1
        %s527 = smul.addr %s526, 4
        %s528 = scalar_lea.vmem [#allocation9], %s527
        %s529 = sand.u32 %s29, 1
        %s530 = scalar_lea.sflag [#allocation10], %s529
        %s531 = sand.u32 %s219, 1
        %s532 = smul.addr %s531, 4
        %s533 = scalar_lea.vmem [#allocation11], %s532
        // Predicated region
        $region53: #{tpu_custom_call.1} parent=39 // pred_check
          %p534 = pneg %p173
        $region54: #{tpu_custom_call.1} parent=39 // pred_check_branch
          %536 = sbr.rel (%p534) target = $region56
        $region55: #{tpu_custom_call.1} parent=39 // pred_region
          %s538 = ssub.s32 64, 64
          %539 = vsyncadd %s520, %s538
          %s540 = sadd.s32 %s34, %s33
          %s541 = smul.addr %s540, 64
          %s542 = scalar_lea.hbm %s5, %s541
          %s544 = sshll.u32 %s523, 4
          %s545 = int_to_ptr.vmem [resolvable:$true] %s544
          %547 = dma.vmem_to_hbm [thread:$0]  %s545, 64, %s542, %s520
        $region56: #{tpu_custom_call.1} parent=39 // pred_fallthru
          _
        // Predicated region
        $region57: #{tpu_custom_call.1} parent=39 // pred_check
          %p548 = pneg %p201
        $region58: #{tpu_custom_call.1} parent=39 // pred_check_branch
          %550 = sbr.rel (%p548) target = $region60
        $region59: #{tpu_custom_call.1} parent=39 // pred_region
          %s552 = ssub.s32 64, 64
          %553 = vsyncadd %s525, %s552
          %s554 = sadd.s32 %s34, %s33
          %s555 = smul.addr %s554, 64
          %s556 = scalar_lea.hbm %s6, %s555
          %s558 = sshll.u32 %s528, 4
          %s559 = int_to_ptr.vmem [resolvable:$true] %s558
          %561 = dma.vmem_to_hbm [thread:$0]  %s559, 64, %s556, %s525
        $region60: #{tpu_custom_call.1} parent=39 // pred_fallthru
          _
        // Predicated region
        $region61: #{tpu_custom_call.1} parent=39 // pred_check
          %p562 = pneg %p229
        $region62: #{tpu_custom_call.1} parent=39 // pred_check_branch
          %564 = sbr.rel (%p562) target = $region64
        $region63: #{tpu_custom_call.1} parent=39 // pred_region
          %s566 = ssub.s32 64, 64
          %567 = vsyncadd %s530, %s566
          %s568 = sadd.s32 %s34, %s33
          %s569 = smul.addr %s568, 64
          %s570 = scalar_lea.hbm %s7, %s569
          %s572 = sshll.u32 %s533, 4
          %s573 = int_to_ptr.vmem [resolvable:$true] %s572
          %575 = dma.vmem_to_hbm [thread:$0]  %s573, 64, %s570, %s530
        $region64: #{tpu_custom_call.1} parent=39 // pred_fallthru
          _
      $region40: #{tpu_custom_call.1} parent=5 // pred_fallthru
        _
      %p576 = scmp.le.s32.totalorder 2, %s24
      // Predicated region
      $region65: #{tpu_custom_call.1} parent=5 // pred_check
        %p577 = pneg %p576
      $region66: #{tpu_custom_call.1} parent=5 // pred_check_branch
        %579 = sbr.rel (%p577) target = $region68
      $region67: #{tpu_custom_call.1} parent=5 // pred_region
        %s580 = ssub.s32 %s24, 2
        // Predicated region
        $region69: #{tpu_custom_call.1} parent=67 // pred_check
          %p581 = pneg %p179
        $region70: #{tpu_custom_call.1} parent=67 // pred_check_branch
          %583 = sbr.rel (%p581) target = $region72
        $region71: #{tpu_custom_call.1} parent=67 // pred_region
          %s584 = sand.u32 %s164, 1
          %s585 = scalar_lea.sflag [#allocation4], %s584
          %s586 = sand.u32 %s164, 1
          %s587 = smul.addr %s586, 4
          %s588 = scalar_lea.vmem [#allocation8], %s587
          %589 = dma.done %s585, 64
        $region72: #{tpu_custom_call.1} parent=67 // pred_fallthru
          _
        // Predicated region
        $region73: #{tpu_custom_call.1} parent=67 // pred_check
          %p590 = pneg %p207
        $region74: #{tpu_custom_call.1} parent=67 // pred_check_branch
          %592 = sbr.rel (%p590) target = $region76
        $region75: #{tpu_custom_call.1} parent=67 // pred_region
          %s593 = sand.u32 %s30, 1
          %s594 = scalar_lea.sflag [#allocation10], %s593
          %s595 = sand.u32 %s192, 1
          %s596 = smul.addr %s595, 4
          %s597 = scalar_lea.vmem [#allocation9], %s596
          %598 = dma.done %s594, 64
        $region76: #{tpu_custom_call.1} parent=67 // pred_fallthru
          _
        // Predicated region
        $region77: #{tpu_custom_call.1} parent=67 // pred_check
          %p599 = pneg %p235
        $region78: #{tpu_custom_call.1} parent=67 // pred_check_branch
          %601 = sbr.rel (%p599) target = $region80
        $region79: #{tpu_custom_call.1} parent=67 // pred_region
          %s602 = sand.u32 %s30, 1
          %s603 = scalar_lea.sflag [#allocation10], %s602
          %s604 = sand.u32 %s220, 1
          %s605 = smul.addr %s604, 4
          %s606 = scalar_lea.vmem [#allocation11], %s605
          %607 = dma.done %s603, 64
        $region80: #{tpu_custom_call.1} parent=67 // pred_fallthru
          _
      $region68: #{tpu_custom_call.1} parent=5 // pred_fallthru
        _
    $region6: #{tpu_custom_call.1} parent=1 // loop_footer
      %s28 = sadd.s32 1, %s24
    $region7: #{tpu_custom_call.1} parent=1 // loop_footer_branch
      %23 = sbr.rel target = $region3
    $region8: #{tpu_custom_call.1} parent=1 // loop_exit
      _
    %608 = vsyncpa [#allocation3], 1
    %s609 = scalar_lea.sflag [#allocation3], 1
    %610 = vsyncpa %s609, 1
    %611 = vsyncpa [#allocation6], 1
    %612 = vsyncpa [#allocation4], 1
    %s613 = scalar_lea.sflag [#allocation4], 1
    %614 = vsyncpa %s613, 1
    %615 = vsyncpa [#allocation10], 1
    %s616 = scalar_lea.sflag [#allocation10], 1
    %617 = vsyncpa %s616, 1

</llo_original>
